<compile_context>
chip_gen: v7x
topology: tpu7x:2x2x1
jax: 0.10.0
libtpu: 0.0.40
codegen_flags: <defaults>
</compile_context>

<pallas_src>
import jax
import jax.numpy as jnp
from jax.experimental import pallas as pl
from jax.experimental.pallas import tpu as pltpu

EPS = 1e-6

# problem sizes (small, consistent with a Darcy-style neuralop dataset sample)
B, CIN, COUT, H, W = 2, 4, 3, 16, 16
HW = H * W
CPOS = 2                 # positional encoding appends 2 grid channels
CMODEL_IN = CIN + CPOS   # model sees normalized x concatenated with the grid
NSTAT = CIN + COUT       # packed per-channel stats length


def processor_kernel(x_ref, stats_ref, wb_ref, y_ref, xproc_ref, out_ref, yn_ref):
    # ---- packed normalizer stats (single DMA): row 0 = means, row 1 = 1/(std+eps)
    mu_in   = stats_ref[0:1, 0:CIN, :]                        # (1, CIN, 1)
    isd_in  = stats_ref[1:2, 0:CIN, :]
    mu_out  = stats_ref[0:1, CIN:NSTAT, :]                    # (1, COUT, 1)
    isd_out = stats_ref[1:2, CIN:NSTAT, :]

    # ---- in_normalizer.transform(x):  (x - mean) * 1/(std + eps)  (reciprocal precomputed)
    xn = (x_ref[...] - mu_in) * isd_in                        # (B, CIN, HW)

    # ---- positional encoding, batch-invariant, generated on the VPU:
    #      flat index k = i*W + j  ->  grid_x = i/H, grid_y = j/W
    #      (float floor path is exact here: k <= 255, W a power of two)
    kf = jax.lax.broadcasted_iota(jnp.int32, (1, HW), 1).astype(jnp.float32)
    row = jnp.floor(kf * (1.0 / W))                           # (1, HW)
    col = kf - row * W
    gx = row * (1.0 / H)                                      # (1, HW)
    gy = col * (1.0 / W)

    # ---- preprocessed x = concat([xn, grid], channel): ONE unmasked full-tile store
    pos = jnp.concatenate([gx[:, None, :], gy[:, None, :]], axis=1)      # (1, 2, HW)
    xproc_ref[...] = jnp.concatenate(
        [xn, jnp.broadcast_to(pos, (B, CPOS, HW))], axis=1)              # (B, CIN+2, HW)

    # ---- model(concat([xn, pos])) as a pointwise channel map, unrolled on the VPU.
    #      Input normalization is folded into wb (done in the wrapper), so channels are
    #      read directly from x_ref (plain vlds).  Weights/bias are scalars from SMEM.
    #      wb layout: [:, 0:CIN] folded x-weights, [:, CIN:CIN+2] pos-weights, [:, -1] bias.
    xc = [x_ref[:, c, :] for c in range(CIN)]                 # each (B, HW)
    outs = []
    for o in range(COUT):
        acc = (wb_ref[o, CIN] * gx + wb_ref[o, CIN + 1] * gy
               + wb_ref[o, CIN + CPOS])                       # (1, HW) batch-invariant part
        for c in range(CIN):
            acc = acc + wb_ref[o, c] * xc[c]                  # broadcasts to (B, HW)
        outs.append(acc[:, None, :])                          # (B, 1, HW)
    out_ref[...] = jnp.concatenate(outs, axis=1)              # (B, COUT, HW): ONE full store

    # ---- out_normalizer.transform(y)  (training branch: `self.train` is truthy)
    yn_ref[...] = (y_ref[...] - mu_out) * isd_out


def _make_pos_grid(h, w):
    # neuralop regular_grid over [0,1]x[0,1]: linspace(0, 1, N+1)[:-1] -> i/H, j/W
    gx = jnp.linspace(0.0, 1.0, h + 1, dtype=jnp.float32)[:-1]
    gy = jnp.linspace(0.0, 1.0, w + 1, dtype=jnp.float32)[:-1]
    grid_x = jnp.broadcast_to(gx[:, None], (h, w))
    grid_y = jnp.broadcast_to(gy[None, :], (h, w))
    return jnp.stack([grid_x, grid_y], axis=0).reshape(1, CPOS, h * w)  # (1, 2, H*W)


def default_data_processor_forward(x, y, mu_in, sd_in, mu_out, sd_out, w, bias):
    """Returns (output, data_dict) matching DefaultDataProcessor.forward semantics."""
    b_, cin, h, w_ = x.shape
    assert (b_, cin, h, w_) == (B, CIN, H, W)
    x_flat = x.reshape(B, CIN, HW)
    y_flat = y.reshape(B, COUT, HW)

    # exact reciprocals precomputed once -> kernel uses multiplies only
    inv_sd_in = 1.0 / (sd_in + EPS)                           # (1, CIN, 1)
    inv_sd_out = 1.0 / (sd_out + EPS)                         # (1, COUT, 1)

    # pack the four per-channel stat vectors into ONE small VMEM block -> one DMA
    stats = jnp.concatenate(
        [jnp.concatenate([mu_in, mu_out], axis=1),
         jnp.concatenate([inv_sd_in, inv_sd_out], axis=1)],
        axis=0)                                               # (2, CIN+COUT, 1)

    # fold the input normalization into the model's channel weights:
    #   W_x @ ((x - mu)*isd) + W_p @ pos + b == (W_x*isd) @ x + W_p @ pos + (b - W_x @ (mu*isd))
    isd_vec = inv_sd_in.reshape(CIN)
    mu_vec = mu_in.reshape(CIN)
    w_x = w[:, :CIN] * isd_vec[None, :]                       # (COUT, CIN)
    b_eff = bias - w[:, :CIN] @ (mu_vec * isd_vec)            # (COUT,)
    wb = jnp.concatenate([w_x, w[:, CIN:], b_eff[:, None]], axis=1)  # (COUT, CIN+CPOS+1)

    grid_spec = pltpu.PrefetchScalarGridSpec(
        num_scalar_prefetch=0,
        grid=(1,),  # tiny problem: one invocation, everything resident in VMEM/SMEM
        # TODO(synk): for realistic neuralop sizes, tile B / HW on the grid with "parallel"
        #             semantics and set vmem_limit_bytes explicitly (v7x has only 64 MiB VMEM).
        in_specs=[
            pl.BlockSpec((B, CIN, HW), lambda i: (0, 0, 0)),             # x
            pl.BlockSpec((2, NSTAT, 1), lambda i: (0, 0, 0)),            # packed stats
            pl.BlockSpec(memory_space=pltpu.MemorySpace.SMEM),           # packed weights + bias
            pl.BlockSpec((B, COUT, HW), lambda i: (0, 0, 0)),            # y
        ],
        out_specs=[
            pl.BlockSpec((B, CMODEL_IN, HW), lambda i: (0, 0, 0)),       # preprocessed x (with pos)
            pl.BlockSpec((B, COUT, HW), lambda i: (0, 0, 0)),            # model output
            pl.BlockSpec((B, COUT, HW), lambda i: (0, 0, 0)),            # normalized y
        ],
    )

    xproc, out, yn = pl.pallas_call(
        processor_kernel,
        out_shape=(
            jax.ShapeDtypeStruct((B, CMODEL_IN, HW), jnp.float32),
            jax.ShapeDtypeStruct((B, COUT, HW), jnp.float32),
            jax.ShapeDtypeStruct((B, COUT, HW), jnp.float32),
        ),
        grid_spec=grid_spec,
        compiler_params=pltpu.CompilerParams(
            dimension_semantics=("arbitrary",)),
    )(x_flat, stats, wb, y_flat)

    output = out.reshape(B, COUT, H, W)
    data_dict = {"x": xproc.reshape(B, CMODEL_IN, H, W),
                 "y": yn.reshape(B, COUT, H, W)}
    # postprocess: `self.train` truthy in the reference -> no inverse_transform applied
    return output, data_dict


if __name__ == "__main__":
    key = jax.random.PRNGKey(0)
    k = jax.random.split(key, 8)
    x = jax.random.normal(k[0], (B, CIN, H, W), dtype=jnp.float32)
    y = jax.random.normal(k[1], (B, COUT, H, W), dtype=jnp.float32)

    # deterministic "UnitGaussianNormalizer" statistics (per-channel)
    mu_in = jnp.arange(CIN, dtype=jnp.float32).reshape(1, CIN, 1) * 0.1
    sd_in = 1.0 + 0.05 * jnp.arange(CIN, dtype=jnp.float32).reshape(1, CIN, 1)
    mu_out = jnp.arange(COUT, dtype=jnp.float32).reshape(1, COUT, 1) * 0.2
    sd_out = 1.0 + 0.1 * jnp.arange(COUT, dtype=jnp.float32).reshape(1, COUT, 1)

    # deterministic pointwise (1x1-conv) model parameters
    w = (0.01 * jnp.arange(COUT * CMODEL_IN, dtype=jnp.float32)
         ).reshape(COUT, CMODEL_IN)
    bias = 0.1 * jnp.arange(COUT, dtype=jnp.float32)                 # (COUT,)

    output, data_dict = jax.jit(default_data_processor_forward)(
        x, y, mu_in, sd_in, mu_out, sd_out, w, bias)
    jax.block_until_ready((output, data_dict))

    # reference check in plain JAX (unfolded weights / true divides)
    xn_ref = (x.reshape(B, CIN, HW) - mu_in) / (sd_in + EPS)
    pos = _make_pos_grid(H, W)
    xcat = jnp.concatenate([xn_ref, jnp.broadcast_to(pos, (B, CPOS, HW))], axis=1)
    out_ref = jnp.einsum("oc,bcn->bon", w, xcat) + bias[None, :, None]
    yn_ref = (y.reshape(B, COUT, HW) - mu_out) / (sd_out + EPS)
    assert jnp.allclose(output, out_ref.reshape(B, COUT, H, W), atol=1e-4)
    assert jnp.allclose(data_dict["x"], xcat.reshape(B, CMODEL_IN, H, W), atol=1e-5)
    assert jnp.allclose(data_dict["y"], yn_ref.reshape(B, COUT, H, W), atol=1e-5)

    print("KERNEL_OK")
</pallas_src>

<mosaic_0001>
module attributes {stable_mosaic.version = 11 : i64} {
  func.func @processor_kernel(%arg0: i32, %arg1: memref<2x4x256xf32, #tpu.memory_space<vmem>>, %arg2: memref<2x7x1xf32, #tpu.memory_space<vmem>>, %arg3: memref<3x7xf32, #tpu.memory_space<smem>>, %arg4: memref<2x3x256xf32, #tpu.memory_space<vmem>>, %arg5: memref<2x6x256xf32, #tpu.memory_space<vmem>>, %arg6: memref<2x3x256xf32, #tpu.memory_space<vmem>>, %arg7: memref<2x3x256xf32, #tpu.memory_space<vmem>>) attributes {dimension_semantics = [#tpu.dimension_semantics<arbitrary>], iteration_bounds = array<i64: 1>, scalar_prefetch = 0 : i64, scratch_operands = 0 : i64, tpu.core_type = #tpu.core_type<tc>, window_params = [{pipeline_mode = #tpu.pipeline_mode<synchronous>, transform_indices = @transform_0, window_bounds = array<i64: 2, 4, 256>}, {pipeline_mode = #tpu.pipeline_mode<synchronous>, transform_indices = @transform_1, window_bounds = array<i64: 2, 7, 1>}, {transform_indices = @transform_2, window_bounds = array<i64: 3, 7>}, {pipeline_mode = #tpu.pipeline_mode<synchronous>, transform_indices = @transform_3, window_bounds = array<i64: 2, 3, 256>}, {pipeline_mode = #tpu.pipeline_mode<synchronous>, transform_indices = @transform_4, window_bounds = array<i64: 2, 6, 256>}, {pipeline_mode = #tpu.pipeline_mode<synchronous>, transform_indices = @transform_5, window_bounds = array<i64: 2, 3, 256>}, {pipeline_mode = #tpu.pipeline_mode<synchronous>, transform_indices = @transform_6, window_bounds = array<i64: 2, 3, 256>}]} {
    %c0 = arith.constant 0 : index
    %c0_0 = arith.constant 0 : index
    %c0_1 = arith.constant 0 : index
    %0 = vector.load %arg2[%c0, %c0_0, %c0_1] : memref<2x7x1xf32, #tpu.memory_space<vmem>>, vector<1x4x1xf32>
    %c1 = arith.constant 1 : index
    %c0_2 = arith.constant 0 : index
    %c0_3 = arith.constant 0 : index
    %1 = vector.load %arg2[%c1, %c0_2, %c0_3] : memref<2x7x1xf32, #tpu.memory_space<vmem>>, vector<1x4x1xf32>
    %c0_4 = arith.constant 0 : index
    %c4 = arith.constant 4 : index
    %c0_5 = arith.constant 0 : index
    %2 = vector.load %arg2[%c0_4, %c4, %c0_5] : memref<2x7x1xf32, #tpu.memory_space<vmem>>, vector<1x3x1xf32>
    %c1_6 = arith.constant 1 : index
    %c4_7 = arith.constant 4 : index
    %c0_8 = arith.constant 0 : index
    %3 = vector.load %arg2[%c1_6, %c4_7, %c0_8] : memref<2x7x1xf32, #tpu.memory_space<vmem>>, vector<1x3x1xf32>
    %c0_9 = arith.constant 0 : index
    %c0_10 = arith.constant 0 : index
    %c0_11 = arith.constant 0 : index
    %4 = vector.load %arg1[%c0_9, %c0_10, %c0_11] : memref<2x4x256xf32, #tpu.memory_space<vmem>>, vector<2x4x256xf32>
    %5 = vector.broadcast %0 : vector<1x4x1xf32> to vector<2x4x256xf32>
    %6 = arith.subf %4, %5 : vector<2x4x256xf32>
    %7 = vector.broadcast %1 : vector<1x4x1xf32> to vector<2x4x256xf32>
    %8 = arith.mulf %6, %7 : vector<2x4x256xf32>
    %9 = tpu.iota {dimensions = array<i32: 1>} : vector<1x256xi32>
    %10 = arith.sitofp %9 : vector<1x256xi32> to vector<1x256xf32>
    %cst = arith.constant 6.250000e-02 : f32
    %11 = vector.broadcast %cst : f32 to vector<1x256xf32>
    %12 = arith.mulf %10, %11 : vector<1x256xf32>
    %13 = math.floor %12 : vector<1x256xf32>
    %cst_12 = arith.constant 1.600000e+01 : f32
    %14 = vector.broadcast %cst_12 : f32 to vector<1x256xf32>
    %15 = arith.mulf %13, %14 : vector<1x256xf32>
    %16 = arith.subf %10, %15 : vector<1x256xf32>
    %cst_13 = arith.constant 6.250000e-02 : f32
    %17 = vector.broadcast %cst_13 : f32 to vector<1x256xf32>
    %18 = arith.mulf %13, %17 : vector<1x256xf32>
    %cst_14 = arith.constant 6.250000e-02 : f32
    %19 = vector.broadcast %cst_14 : f32 to vector<1x256xf32>
    %20 = arith.mulf %16, %19 : vector<1x256xf32>
    %21 = vector.shape_cast %18 : vector<1x256xf32> to vector<1x1x256xf32>
    %22 = vector.shape_cast %20 : vector<1x256xf32> to vector<1x1x256xf32>
    %23 = tpu.concatenate %21, %22 in 1 : vector<1x1x256xf32>, vector<1x1x256xf32> -> vector<1x2x256xf32>
    %24 = vector.shape_cast %23 : vector<1x2x256xf32> to vector<1x2x256xf32>
    %25 = vector.broadcast %24 : vector<1x2x256xf32> to vector<2x2x256xf32>
    %26 = tpu.concatenate %8, %25 in 1 : vector<2x4x256xf32>, vector<2x2x256xf32> -> vector<2x6x256xf32>
    %c0_15 = arith.constant 0 : index
    %c0_16 = arith.constant 0 : index
    %c0_17 = arith.constant 0 : index
    %27 = vector.load %arg5[%c0_15, %c0_16, %c0_17] : memref<2x6x256xf32, #tpu.memory_space<vmem>>, vector<2x6x256xf32>
    tpu.vector_store %arg5[%c0_15, %c0_16, %c0_17], %26 {strides = array<i32>} : memref<2x6x256xf32, #tpu.memory_space<vmem>>, vector<2x6x256xf32>,
    %c0_18 = arith.constant 0 : index
    %c0_19 = arith.constant 0 : index
    %c0_20 = arith.constant 0 : index
    %28 = vector.load %arg1[%c0_18, %c0_19, %c0_20] : memref<2x4x256xf32, #tpu.memory_space<vmem>>, vector<2x1x256xf32>
    %29 = vector.shape_cast %28 : vector<2x1x256xf32> to vector<2x256xf32>
    %c0_21 = arith.constant 0 : index
    %c1_22 = arith.constant 1 : index
    %c0_23 = arith.constant 0 : index
    %30 = vector.load %arg1[%c0_21, %c1_22, %c0_23] : memref<2x4x256xf32, #tpu.memory_space<vmem>>, vector<2x1x256xf32>
    %31 = vector.shape_cast %30 : vector<2x1x256xf32> to vector<2x256xf32>
    %c0_24 = arith.constant 0 : index
    %c2 = arith.constant 2 : index
    %c0_25 = arith.constant 0 : index
    %32 = vector.load %arg1[%c0_24, %c2, %c0_25] : memref<2x4x256xf32, #tpu.memory_space<vmem>>, vector<2x1x256xf32>
    %33 = vector.shape_cast %32 : vector<2x1x256xf32> to vector<2x256xf32>
    %c0_26 = arith.constant 0 : index
    %c3 = arith.constant 3 : index
    %c0_27 = arith.constant 0 : index
    %34 = vector.load %arg1[%c0_26, %c3, %c0_27] : memref<2x4x256xf32, #tpu.memory_space<vmem>>, vector<2x1x256xf32>
    %35 = vector.shape_cast %34 : vector<2x1x256xf32> to vector<2x256xf32>
    %c0_28 = arith.constant 0 : index
    %c4_29 = arith.constant 4 : index
    %36 = memref.load %arg3[%c0_28, %c4_29] : memref<3x7xf32, #tpu.memory_space<smem>>
    %37 = vector.broadcast %36 : f32 to vector<1x256xf32>
    %38 = arith.mulf %37, %18 : vector<1x256xf32>
    %c0_30 = arith.constant 0 : index
    %c5 = arith.constant 5 : index
    %39 = memref.load %arg3[%c0_30, %c5] : memref<3x7xf32, #tpu.memory_space<smem>>
    %40 = vector.broadcast %39 : f32 to vector<1x256xf32>
    %41 = arith.mulf %40, %20 : vector<1x256xf32>
    %42 = arith.addf %38, %41 : vector<1x256xf32>
    %c0_31 = arith.constant 0 : index
    %c6 = arith.constant 6 : index
    %43 = memref.load %arg3[%c0_31, %c6] : memref<3x7xf32, #tpu.memory_space<smem>>
    %44 = vector.broadcast %43 : f32 to vector<1x256xf32>
    %45 = arith.addf %42, %44 : vector<1x256xf32>
    %c0_32 = arith.constant 0 : index
    %c0_33 = arith.constant 0 : index
    %46 = memref.load %arg3[%c0_32, %c0_33] : memref<3x7xf32, #tpu.memory_space<smem>>
    %47 = vector.broadcast %46 : f32 to vector<2x256xf32>
    %48 = arith.mulf %47, %29 : vector<2x256xf32>
    %49 = vector.broadcast %45 : vector<1x256xf32> to vector<2x256xf32>
    %50 = arith.addf %49, %48 : vector<2x256xf32>
    %c0_34 = arith.constant 0 : index
    %c1_35 = arith.constant 1 : index
    %51 = memref.load %arg3[%c0_34, %c1_35] : memref<3x7xf32, #tpu.memory_space<smem>>
    %52 = vector.broadcast %51 : f32 to vector<2x256xf32>
    %53 = arith.mulf %52, %31 : vector<2x256xf32>
    %54 = arith.addf %50, %53 : vector<2x256xf32>
    %c0_36 = arith.constant 0 : index
    %c2_37 = arith.constant 2 : index
    %55 = memref.load %arg3[%c0_36, %c2_37] : memref<3x7xf32, #tpu.memory_space<smem>>
    %56 = vector.broadcast %55 : f32 to vector<2x256xf32>
    %57 = arith.mulf %56, %33 : vector<2x256xf32>
    %58 = arith.addf %54, %57 : vector<2x256xf32>
    %c0_38 = arith.constant 0 : index
    %c3_39 = arith.constant 3 : index
    %59 = memref.load %arg3[%c0_38, %c3_39] : memref<3x7xf32, #tpu.memory_space<smem>>
    %60 = vector.broadcast %59 : f32 to vector<2x256xf32>
    %61 = arith.mulf %60, %35 : vector<2x256xf32>
    %62 = arith.addf %58, %61 : vector<2x256xf32>
    %63 = vector.shape_cast %62 : vector<2x256xf32> to vector<2x1x256xf32>
    %c1_40 = arith.constant 1 : index
    %c4_41 = arith.constant 4 : index
    %64 = memref.load %arg3[%c1_40, %c4_41] : memref<3x7xf32, #tpu.memory_space<smem>>
    %65 = vector.broadcast %64 : f32 to vector<1x256xf32>
    %66 = arith.mulf %65, %18 : vector<1x256xf32>
    %c1_42 = arith.constant 1 : index
    %c5_43 = arith.constant 5 : index
    %67 = memref.load %arg3[%c1_42, %c5_43] : memref<3x7xf32, #tpu.memory_space<smem>>
    %68 = vector.broadcast %67 : f32 to vector<1x256xf32>
    %69 = arith.mulf %68, %20 : vector<1x256xf32>
    %70 = arith.addf %66, %69 : vector<1x256xf32>
    %c1_44 = arith.constant 1 : index
    %c6_45 = arith.constant 6 : index
    %71 = memref.load %arg3[%c1_44, %c6_45] : memref<3x7xf32, #tpu.memory_space<smem>>
    %72 = vector.broadcast %71 : f32 to vector<1x256xf32>
    %73 = arith.addf %70, %72 : vector<1x256xf32>
    %c1_46 = arith.constant 1 : index
    %c0_47 = arith.constant 0 : index
    %74 = memref.load %arg3[%c1_46, %c0_47] : memref<3x7xf32, #tpu.memory_space<smem>>
    %75 = vector.broadcast %74 : f32 to vector<2x256xf32>
    %76 = arith.mulf %75, %29 : vector<2x256xf32>
    %77 = vector.broadcast %73 : vector<1x256xf32> to vector<2x256xf32>
    %78 = arith.addf %77, %76 : vector<2x256xf32>
    %c1_48 = arith.constant 1 : index
    %c1_49 = arith.constant 1 : index
    %79 = memref.load %arg3[%c1_48, %c1_49] : memref<3x7xf32, #tpu.memory_space<smem>>
    %80 = vector.broadcast %79 : f32 to vector<2x256xf32>
    %81 = arith.mulf %80, %31 : vector<2x256xf32>
    %82 = arith.addf %78, %81 : vector<2x256xf32>
    %c1_50 = arith.constant 1 : index
    %c2_51 = arith.constant 2 : index
    %83 = memref.load %arg3[%c1_50, %c2_51] : memref<3x7xf32, #tpu.memory_space<smem>>
    %84 = vector.broadcast %83 : f32 to vector<2x256xf32>
    %85 = arith.mulf %84, %33 : vector<2x256xf32>
    %86 = arith.addf %82, %85 : vector<2x256xf32>
    %c1_52 = arith.constant 1 : index
    %c3_53 = arith.constant 3 : index
    %87 = memref.load %arg3[%c1_52, %c3_53] : memref<3x7xf32, #tpu.memory_space<smem>>
    %88 = vector.broadcast %87 : f32 to vector<2x256xf32>
    %89 = arith.mulf %88, %35 : vector<2x256xf32>
    %90 = arith.addf %86, %89 : vector<2x256xf32>
    %91 = vector.shape_cast %90 : vector<2x256xf32> to vector<2x1x256xf32>
    %c2_54 = arith.constant 2 : index
    %c4_55 = arith.constant 4 : index
    %92 = memref.load %arg3[%c2_54, %c4_55] : memref<3x7xf32, #tpu.memory_space<smem>>
    %93 = vector.broadcast %92 : f32 to vector<1x256xf32>
    %94 = arith.mulf %93, %18 : vector<1x256xf32>
    %c2_56 = arith.constant 2 : index
    %c5_57 = arith.constant 5 : index
    %95 = memref.load %arg3[%c2_56, %c5_57] : memref<3x7xf32, #tpu.memory_space<smem>>
    %96 = vector.broadcast %95 : f32 to vector<1x256xf32>
    %97 = arith.mulf %96, %20 : vector<1x256xf32>
    %98 = arith.addf %94, %97 : vector<1x256xf32>
    %c2_58 = arith.constant 2 : index
    %c6_59 = arith.constant 6 : index
    %99 = memref.load %arg3[%c2_58, %c6_59] : memref<3x7xf32, #tpu.memory_space<smem>>
    %100 = vector.broadcast %99 : f32 to vector<1x256xf32>
    %101 = arith.addf %98, %100 : vector<1x256xf32>
    %c2_60 = arith.constant 2 : index
    %c0_61 = arith.constant 0 : index
    %102 = memref.load %arg3[%c2_60, %c0_61] : memref<3x7xf32, #tpu.memory_space<smem>>
    %103 = vector.broadcast %102 : f32 to vector<2x256xf32>
    %104 = arith.mulf %103, %29 : vector<2x256xf32>
    %105 = vector.broadcast %101 : vector<1x256xf32> to vector<2x256xf32>
    %106 = arith.addf %105, %104 : vector<2x256xf32>
    %c2_62 = arith.constant 2 : index
    %c1_63 = arith.constant 1 : index
    %107 = memref.load %arg3[%c2_62, %c1_63] : memref<3x7xf32, #tpu.memory_space<smem>>
    %108 = vector.broadcast %107 : f32 to vector<2x256xf32>
    %109 = arith.mulf %108, %31 : vector<2x256xf32>
    %110 = arith.addf %106, %109 : vector<2x256xf32>
    %c2_64 = arith.constant 2 : index
    %c2_65 = arith.constant 2 : index
    %111 = memref.load %arg3[%c2_64, %c2_65] : memref<3x7xf32, #tpu.memory_space<smem>>
    %112 = vector.broadcast %111 : f32 to vector<2x256xf32>
    %113 = arith.mulf %112, %33 : vector<2x256xf32>
    %114 = arith.addf %110, %113 : vector<2x256xf32>
    %c2_66 = arith.constant 2 : index
    %c3_67 = arith.constant 3 : index
    %115 = memref.load %arg3[%c2_66, %c3_67] : memref<3x7xf32, #tpu.memory_space<smem>>
    %116 = vector.broadcast %115 : f32 to vector<2x256xf32>
    %117 = arith.mulf %116, %35 : vector<2x256xf32>
    %118 = arith.addf %114, %117 : vector<2x256xf32>
    %119 = vector.shape_cast %118 : vector<2x256xf32> to vector<2x1x256xf32>
    %120 = tpu.concatenate %63, %91, %119 in 1 : vector<2x1x256xf32>, vector<2x1x256xf32>, vector<2x1x256xf32> -> vector<2x3x256xf32>
    %c0_68 = arith.constant 0 : index
    %c0_69 = arith.constant 0 : index
    %c0_70 = arith.constant 0 : index
    %121 = vector.load %arg6[%c0_68, %c0_69, %c0_70] : memref<2x3x256xf32, #tpu.memory_space<vmem>>, vector<2x3x256xf32>
    tpu.vector_store %arg6[%c0_68, %c0_69, %c0_70], %120 {strides = array<i32>} : memref<2x3x256xf32, #tpu.memory_space<vmem>>, vector<2x3x256xf32>,
    %c0_71 = arith.constant 0 : index
    %c0_72 = arith.constant 0 : index
    %c0_73 = arith.constant 0 : index
    %122 = vector.load %arg4[%c0_71, %c0_72, %c0_73] : memref<2x3x256xf32, #tpu.memory_space<vmem>>, vector<2x3x256xf32>
    %123 = vector.broadcast %2 : vector<1x3x1xf32> to vector<2x3x256xf32>
    %124 = arith.subf %122, %123 : vector<2x3x256xf32>
    %125 = vector.broadcast %3 : vector<1x3x1xf32> to vector<2x3x256xf32>
    %126 = arith.mulf %124, %125 : vector<2x3x256xf32>
    %c0_74 = arith.constant 0 : index
    %c0_75 = arith.constant 0 : index
    %c0_76 = arith.constant 0 : index
    %127 = vector.load %arg7[%c0_74, %c0_75, %c0_76] : memref<2x3x256xf32, #tpu.memory_space<vmem>>, vector<2x3x256xf32>
    tpu.vector_store %arg7[%c0_74, %c0_75, %c0_76], %126 {strides = array<i32>} : memref<2x3x256xf32, #tpu.memory_space<vmem>>, vector<2x3x256xf32>,
    return
  }
  func.func @transform_0(%arg0: i32) -> (i32, i32, i32) {
    %c0_i32 = arith.constant 0 : i32
    %c0_i32_0 = arith.constant 0 : i32
    %c0_i32_1 = arith.constant 0 : i32
    %c0_i32_2 = arith.constant 0 : i32
    return %c0_i32, %c0_i32_0, %c0_i32_1 : i32, i32, i32
  }
  func.func @transform_1(%arg0: i32) -> (i32, i32, i32) {
    %c0_i32 = arith.constant 0 : i32
    %c0_i32_0 = arith.constant 0 : i32
    %c0_i32_1 = arith.constant 0 : i32
    %c0_i32_2 = arith.constant 0 : i32
    return %c0_i32, %c0_i32_0, %c0_i32_1 : i32, i32, i32
  }
  func.func @transform_2(%arg0: i32) -> (i32, i32) {
    %c0_i32 = arith.constant 0 : i32
    %c0_i32_0 = arith.constant 0 : i32
    %c0_i32_1 = arith.constant 0 : i32
    return %c0_i32, %c0_i32_0 : i32, i32
  }
  func.func @transform_3(%arg0: i32) -> (i32, i32, i32) {
    %c0_i32 = arith.constant 0 : i32
    %c0_i32_0 = arith.constant 0 : i32
    %c0_i32_1 = arith.constant 0 : i32
    %c0_i32_2 = arith.constant 0 : i32
    return %c0_i32, %c0_i32_0, %c0_i32_1 : i32, i32, i32
  }
  func.func @transform_4(%arg0: i32) -> (i32, i32, i32) {
    %c0_i32 = arith.constant 0 : i32
    %c0_i32_0 = arith.constant 0 : i32
    %c0_i32_1 = arith.constant 0 : i32
    %c0_i32_2 = arith.constant 0 : i32
    return %c0_i32, %c0_i32_0, %c0_i32_1 : i32, i32, i32
  }
  func.func @transform_5(%arg0: i32) -> (i32, i32, i32) {
    %c0_i32 = arith.constant 0 : i32
    %c0_i32_0 = arith.constant 0 : i32
    %c0_i32_1 = arith.constant 0 : i32
    %c0_i32_2 = arith.constant 0 : i32
    return %c0_i32, %c0_i32_0, %c0_i32_1 : i32, i32, i32
  }
  func.func @transform_6(%arg0: i32) -> (i32, i32, i32) {
    %c0_i32 = arith.constant 0 : i32
    %c0_i32_0 = arith.constant 0 : i32
    %c0_i32_1 = arith.constant 0 : i32
    %c0_i32_2 = arith.constant 0 : i32
    return %c0_i32, %c0_i32_0, %c0_i32_1 : i32, i32, i32
  }
}

</mosaic_0001>

<llo_original>
// kernel: default_data_processor_forward.1
$region0: #{default_data_processor_forward.1}
  #allocation0 [shape = 'u32[]', space=smem, size = 0x4, offset = 0x4, fixed_abs, tag = 'smem constant byte address 0x4 - core index']
  #allocation1 [shape = 'u32[144,128]{1,0:T(1,128)}', space=vmem, size = 0x12000, scoped, tag = 'internal scratch']
  %s0 = inlined_call_operand.vmem [shape: f32[2,4,256], index: 0, kind: input, shape index: {}]
  %s1 = inlined_call_operand.vmem [shape: f32[2,7,1], index: 1, kind: input, shape index: {}]
  %s2 = inlined_call_operand.vmem [shape: f32[3,7], index: 2, kind: input, shape index: {}]
  %s3 = inlined_call_operand.vmem [shape: f32[2,3,256], index: 3, kind: input, shape index: {}]
  %s4 = inlined_call_operand.vmem [shape: f32[2,6,256], index: 4, kind: output, shape index: {0}]
  %s5 = inlined_call_operand.vmem [shape: f32[2,3,256], index: 5, kind: output, shape index: {1}]
  %s6 = inlined_call_operand.vmem [shape: f32[2,3,256], index: 6, kind: output, shape index: {2}]
  %7 = xla_tuple %s4, %s5, %s6
  %s8 = sld [smem:[#allocation0]]
  $region46: #{default_data_processor_forward.1} parent=0
    _
  %s10 = ssub.s32 1, %s8
  %s11 = scalar_select 0, %s10, %s8
  $region1: #{default_data_processor_forward.1} parent=0
    #allocation2 [shape = 'u8[2048]{0}', space=smem, size = 0x800, scoped, tag = 'input window, operand 2, single buffered']
    #allocation3 [shape = 's32[1]{0}', space=sflag, size = 0x4, scoped, tag = 'scoped memory for default_data_processor_forward.1']
    %12 = vsyncpa [#allocation3], 0
    // Predicated region
    $region2: #{default_data_processor_forward.1} parent=1 // pred_check
      _
    $region3: #{default_data_processor_forward.1} parent=1 // pred_check_branch
      %14 = sbr.rel (0) target = $region5
    $region4: #{default_data_processor_forward.1} parent=1 // pred_region
      _
    $region5: #{default_data_processor_forward.1} parent=1 // pred_fallthru
      _
    // Predicated region
    $region6: #{default_data_processor_forward.1} parent=1 // pred_check
      _
    $region7: #{default_data_processor_forward.1} parent=1 // pred_check_branch
      %16 = sbr.rel (0) target = $region9
    $region8: #{default_data_processor_forward.1} parent=1 // pred_region
      _
    $region9: #{default_data_processor_forward.1} parent=1 // pred_fallthru
      _
    // Predicated region
    $region10: #{default_data_processor_forward.1} parent=1 // pred_check
      _
    $region11: #{default_data_processor_forward.1} parent=1 // pred_check_branch
      %18 = sbr.rel (0) target = $region13
    $region12: #{default_data_processor_forward.1} parent=1 // pred_region
      %s20 = ssub.s32 64, 64
      %21 = vsyncadd [#allocation3], %s20
      %s23 = sshll.u32 %s2, 4
      %s24 = int_to_ptr.vmem [resolvable:$true] %s23
      %26 = dma.vmem_to_smem %s24, 64, [#allocation2], [#allocation3]
    $region13: #{default_data_processor_forward.1} parent=1 // pred_fallthru
      _
    // Predicated region
    $region14: #{default_data_processor_forward.1} parent=1 // pred_check
      _
    $region15: #{default_data_processor_forward.1} parent=1 // pred_check_branch
      %28 = sbr.rel (0) target = $region17
    $region16: #{default_data_processor_forward.1} parent=1 // pred_region
      _
    $region17: #{default_data_processor_forward.1} parent=1 // pred_fallthru
      _
    // Predicated region
    $region18: #{default_data_processor_forward.1} parent=1 // pred_check
      _
    $region19: #{default_data_processor_forward.1} parent=1 // pred_check_branch
      %30 = sbr.rel (0) target = $region21
    $region20: #{default_data_processor_forward.1} parent=1 // pred_region
      %31 = dma.done [#allocation3], 64
    $region21: #{default_data_processor_forward.1} parent=1 // pred_fallthru
      _
    %32 = sfence
    %v33 = vld [vmem:[%s1] sm:$0xf]
    %s34 = scalar_lea.vmem %s1, 8
    %v35 = vld [vmem:[%s34] sm:$0xf]
    %v36 = vld [vmem:[%s1 + $0x4] sm:$0x7]
    %v37 = vld [vmem:[%s34 + $0x4] sm:$0x7]
    %v38 = vld [vmem:[%s0] sm:$0xff]
    %v39 = vld [vmem:[%s0 + $0x8] sm:$0xff]
    %41 = vset.pattern.permute.xlu0 0
    %42 = vperm.xlu0 %41, %v33
    %v43 = vpop.permute.xlu0 %42
    %v45 = vunpack.c.l.s4 839922192
    %v46 = vunpack.c.0.s8 %v45
    %v47 = vlaneseq
    %v48 = vshrl.u32 %v47, 7
    %v49 = vsub.s32 %v46, %v48
    %v50 = vrot.slane %v43, %v49
    %v52 = vsub.f32 %v38, %v50
    %v53 = vsub.f32 %v39, %v50
    %55 = vset.pattern.permute.xlu0 0
    %56 = vperm.xlu0 %55, %v35
    %v57 = vpop.permute.xlu0 %56
    %v59 = vunpack.c.l.s4 839922192
    %v60 = vunpack.c.0.s8 %v59
    %v61 = vlaneseq
    %v62 = vshrl.u32 %v61, 7
    %v63 = vsub.s32 %v60, %v62
    %v64 = vrot.slane %v57, %v63
    %v66 = vmul.f32 %v52, %v64
    %v67 = vmul.f32 %v53, %v64
    %v68 = vlaneseq
    %v69 = vand.u32 %v68, 127
    %v70 = vadd.s32 %v69, 128
    %v71 = vcvt.s32.f32 %v69
    %v72 = vcvt.s32.f32 %v70
    %v73 = vmul.f32 %v71, 0.0625
    %v74 = vmul.f32 %v72, 0.0625
    %v75 = vfloor.f32 %v73
    %v76 = vfloor.f32 %v74
    %v77 = vmul.f32 %v75, 16.0
    %v78 = vmul.f32 %v76, 16.0
    %v79 = vsub.f32 %v71, %v77
    %v80 = vsub.f32 %v72, %v78
    %v81 = vmul.f32 %v75, 0.0625
    %v82 = vmul.f32 %v76, 0.0625
    %v83 = vmul.f32 %v79, 0.0625
    %v84 = vmul.f32 %v80, 0.0625
    %vm85 = vcmask 1040384
    %v86 = vsel %vm85, %v81, %v83
    %v87 = vsel %vm85, %v82, %v84
    %v90 = vcombine.high %v66, %v66
    %v91 = vcombine.high %v67, %v67
    %v96 = vrot.slane %v86, 4
    %v97 = vrot.slane %v87, 4
    %vm100 = vcmask 1043456
    %v101 = vsel %vm100, %v66, %v96
    %v102 = vsel %vm100, %v90, %v97
    %v103 = vsel %vm100, %v67, %v96
    %v104 = vsel %vm100, %v91, %v97
    %105 = vst [vmem:[%s4] sm:$0x3f] %v101
    %106 = vst [vmem:[%s4 + $0x8] sm:$0x3f] %v102
    %107 = vst [vmem:[%s4 + $0x10] sm:$0x3f] %v103
    %108 = vst [vmem:[%s4 + $0x18] sm:$0x3f] %v104
    %v109 = vld [vmem:[%s0] ss:$4 sm:$0x3]
    %s110 = scalar_lea.vmem %s0, 8
    %v111 = vld [vmem:[%s110] ss:$4 sm:$0x3]
    %s112 = scalar_lea.vmem %s0, 1
    %v113 = vld [vmem:[%s112] ss:$4 sm:$0x3]
    %s114 = scalar_lea.vmem %s0, 9
    %v115 = vld [vmem:[%s114] ss:$4 sm:$0x3]
    %s116 = scalar_lea.vmem %s0, 2
    %v117 = vld [vmem:[%s116] ss:$4 sm:$0x3]
    %s118 = scalar_lea.vmem %s0, 10
    %v119 = vld [vmem:[%s118] ss:$4 sm:$0x3]
    %s120 = scalar_lea.vmem %s0, 3
    %v121 = vld [vmem:[%s120] ss:$4 sm:$0x3]
    %s122 = scalar_lea.vmem %s0, 11
    %v123 = vld [vmem:[%s122] ss:$4 sm:$0x3]
    %s124 = sld [smem:[#allocation2 + $0x4]]
    %v125 = vstv %s124
    %v126 = vmul.f32 %v125, %v81
    %v127 = vmul.f32 %v125, %v82
    %s128 = sld [smem:[#allocation2 + $0x5]]
    %v129 = vstv %s128
    %v130 = vmul.f32 %v129, %v83
    %v131 = vmul.f32 %v129, %v84
    %v132 = vadd.f32 %v126, %v130
    %v133 = vadd.f32 %v127, %v131
    %s134 = sld [smem:[#allocation2 + $0x6]]
    %v135 = vstv %s134
    %v136 = vadd.f32 %v132, %v135
    %v137 = vadd.f32 %v133, %v135
    %s138 = sld [smem:[#allocation2]]
    %v139 = vstv %s138
    %v140 = vmul.f32 %v139, %v109
    %v141 = vmul.f32 %v139, %v111
    %v144 = vcombine.low %v140, %v141
    %v146 = vunpack.c.l.s4 1966171168
    %v147 = vunpack.c.0.s8 %v146
    %v148 = vlaneseq
    %v149 = vshrl.u32 %v148, 7
    %v150 = vsub.s32 %v147, %v149
    %v151 = vrot.slane %v144, %v150
    %v152 = vcombine.high %v151, %v151
    %v154 = vunpack.c.l.s4 1966171168
    %v155 = vunpack.c.0.s8 %v154
    %v156 = vlaneseq
    %v157 = vshrl.u32 %v156, 7
    %v158 = vsub.s32 %v155, %v157
    %v159 = vrot.slane %v151, %v158
    %v161 = vunpack.c.l.s4 1966171168
    %v162 = vunpack.c.0.s8 %v161
    %v163 = vlaneseq
    %v164 = vshrl.u32 %v163, 7
    %v165 = vsub.s32 %v162, %v164
    %v166 = vrot.slane %v152, %v165
    %v169 = vadd.f32 %v136, %v159
    %v170 = vadd.f32 %v137, %v166
    %s171 = sld [smem:[#allocation2 + $0x1]]
    %v172 = vstv %s171
    %v173 = vmul.f32 %v172, %v113
    %v174 = vmul.f32 %v172, %v115
    %v177 = vcombine.low %v173, %v174
    %v179 = vunpack.c.l.s4 1966171168
    %v180 = vunpack.c.0.s8 %v179
    %v181 = vlaneseq
    %v182 = vshrl.u32 %v181, 7
    %v183 = vsub.s32 %v180, %v182
    %v184 = vrot.slane %v177, %v183
    %v185 = vcombine.high %v184, %v184
    %v187 = vunpack.c.l.s4 1966171168
    %v188 = vunpack.c.0.s8 %v187
    %v189 = vlaneseq
    %v190 = vshrl.u32 %v189, 7
    %v191 = vsub.s32 %v188, %v190
    %v192 = vrot.slane %v184, %v191
    %v194 = vunpack.c.l.s4 1966171168
    %v195 = vunpack.c.0.s8 %v194
    %v196 = vlaneseq
    %v197 = vshrl.u32 %v196, 7
    %v198 = vsub.s32 %v195, %v197
    %v199 = vrot.slane %v185, %v198
    %v202 = vadd.f32 %v169, %v192
    %v203 = vadd.f32 %v170, %v199
    %s204 = sld [smem:[#allocation2 + $0x2]]
    %v205 = vstv %s204
    %v206 = vmul.f32 %v205, %v117
    %v207 = vmul.f32 %v205, %v119
    %v210 = vcombine.low %v206, %v207
    %v212 = vunpack.c.l.s4 1966171168
    %v213 = vunpack.c.0.s8 %v212
    %v214 = vlaneseq
    %v215 = vshrl.u32 %v214, 7
    %v216 = vsub.s32 %v213, %v215
    %v217 = vrot.slane %v210, %v216
    %v218 = vcombine.high %v217, %v217
    %v220 = vunpack.c.l.s4 1966171168
    %v221 = vunpack.c.0.s8 %v220
    %v222 = vlaneseq
    %v223 = vshrl.u32 %v222, 7
    %v224 = vsub.s32 %v221, %v223
    %v225 = vrot.slane %v217, %v224
    %v227 = vunpack.c.l.s4 1966171168
    %v228 = vunpack.c.0.s8 %v227
    %v229 = vlaneseq
    %v230 = vshrl.u32 %v229, 7
    %v231 = vsub.s32 %v228, %v230
    %v232 = vrot.slane %v218, %v231
    %v235 = vadd.f32 %v202, %v225
    %v236 = vadd.f32 %v203, %v232
    %s237 = sld [smem:[#allocation2 + $0x3]]
    %v238 = vstv %s237
    %v239 = vmul.f32 %v238, %v121
    %v240 = vmul.f32 %v238, %v123
    %v243 = vcombine.low %v239, %v240
    %v245 = vunpack.c.l.s4 1966171168
    %v246 = vunpack.c.0.s8 %v245
    %v247 = vlaneseq
    %v248 = vshrl.u32 %v247, 7
    %v249 = vsub.s32 %v246, %v248
    %v250 = vrot.slane %v243, %v249
    %v251 = vcombine.high %v250, %v250
    %v253 = vunpack.c.l.s4 1966171168
    %v254 = vunpack.c.0.s8 %v253
    %v255 = vlaneseq
    %v256 = vshrl.u32 %v255, 7
    %v257 = vsub.s32 %v254, %v256
    %v258 = vrot.slane %v250, %v257
    %v260 = vunpack.c.l.s4 1966171168
    %v261 = vunpack.c.0.s8 %v260
    %v262 = vlaneseq
    %v263 = vshrl.u32 %v262, 7
    %v264 = vsub.s32 %v261, %v263
    %v265 = vrot.slane %v251, %v264
    %v268 = vadd.f32 %v235, %v258
    %v269 = vadd.f32 %v236, %v265
    %v272 = vcombine.low %v268, %v269
    %v274 = vunpack.c.l.s4 1966171168
    %v275 = vunpack.c.0.s8 %v274
    %v276 = vlaneseq
    %v277 = vshrl.u32 %v276, 7
    %v278 = vsub.s32 %v275, %v277
    %v279 = vrot.slane %v272, %v278
    %v280 = vcombine.high %v279, %v279
    %v282 = vunpack.c.l.s4 1966171168
    %v283 = vunpack.c.0.s8 %v282
    %v284 = vlaneseq
    %v285 = vshrl.u32 %v284, 7
    %v286 = vsub.s32 %v283, %v285
    %v287 = vrot.slane %v279, %v286
    %v289 = vunpack.c.l.s4 1966171168
    %v290 = vunpack.c.0.s8 %v289
    %v291 = vlaneseq
    %v292 = vshrl.u32 %v291, 7
    %v293 = vsub.s32 %v290, %v292
    %v294 = vrot.slane %v280, %v293
    %s295 = sld [smem:[#allocation2 + $0x84]]
    %v296 = vstv %s295
    %v297 = vmul.f32 %v296, %v81
    %v298 = vmul.f32 %v296, %v82
    %s299 = sld [smem:[#allocation2 + $0x85]]
    %v300 = vstv %s299
    %v301 = vmul.f32 %v300, %v83
    %v302 = vmul.f32 %v300, %v84
    %v303 = vadd.f32 %v297, %v301
    %v304 = vadd.f32 %v298, %v302
    %s305 = sld [smem:[#allocation2 + $0x86]]
    %v306 = vstv %s305
    %v307 = vadd.f32 %v303, %v306
    %v308 = vadd.f32 %v304, %v306
    %s309 = sld [smem:[#allocation2 + $0x80]]
    %v310 = vstv %s309
    %v311 = vmul.f32 %v310, %v109
    %v312 = vmul.f32 %v310, %v111
    %v315 = vcombine.low %v311, %v312
    %v317 = vunpack.c.l.s4 1966171168
    %v318 = vunpack.c.0.s8 %v317
    %v319 = vlaneseq
    %v320 = vshrl.u32 %v319, 7
    %v321 = vsub.s32 %v318, %v320
    %v322 = vrot.slane %v315, %v321
    %v323 = vcombine.high %v322, %v322
    %v325 = vunpack.c.l.s4 1966171168
    %v326 = vunpack.c.0.s8 %v325
    %v327 = vlaneseq
    %v328 = vshrl.u32 %v327, 7
    %v329 = vsub.s32 %v326, %v328
    %v330 = vrot.slane %v322, %v329
    %v332 = vunpack.c.l.s4 1966171168
    %v333 = vunpack.c.0.s8 %v332
    %v334 = vlaneseq
    %v335 = vshrl.u32 %v334, 7
    %v336 = vsub.s32 %v333, %v335
    %v337 = vrot.slane %v323, %v336
    %v340 = vadd.f32 %v307, %v330
    %v341 = vadd.f32 %v308, %v337
    %s342 = sld [smem:[#allocation2 + $0x81]]
    %v343 = vstv %s342
    %v344 = vmul.f32 %v343, %v113
    %v345 = vmul.f32 %v343, %v115
    %v348 = vcombine.low %v344, %v345
    %v350 = vunpack.c.l.s4 1966171168
    %v351 = vunpack.c.0.s8 %v350
    %v352 = vlaneseq
    %v353 = vshrl.u32 %v352, 7
    %v354 = vsub.s32 %v351, %v353
    %v355 = vrot.slane %v348, %v354
    %v356 = vcombine.high %v355, %v355
    %v358 = vunpack.c.l.s4 1966171168
    %v359 = vunpack.c.0.s8 %v358
    %v360 = vlaneseq
    %v361 = vshrl.u32 %v360, 7
    %v362 = vsub.s32 %v359, %v361
    %v363 = vrot.slane %v355, %v362
    %v365 = vunpack.c.l.s4 1966171168
    %v366 = vunpack.c.0.s8 %v365
    %v367 = vlaneseq
    %v368 = vshrl.u32 %v367, 7
    %v369 = vsub.s32 %v366, %v368
    %v370 = vrot.slane %v356, %v369
    %v373 = vadd.f32 %v340, %v363
    %v374 = vadd.f32 %v341, %v370
    %s375 = sld [smem:[#allocation2 + $0x82]]
    %v376 = vstv %s375
    %v377 = vmul.f32 %v376, %v117
    %v378 = vmul.f32 %v376, %v119
    %v381 = vcombine.low %v377, %v378
    %v383 = vunpack.c.l.s4 1966171168
    %v384 = vunpack.c.0.s8 %v383
    %v385 = vlaneseq
    %v386 = vshrl.u32 %v385, 7
    %v387 = vsub.s32 %v384, %v386
    %v388 = vrot.slane %v381, %v387
    %v389 = vcombine.high %v388, %v388
    %v391 = vunpack.c.l.s4 1966171168
    %v392 = vunpack.c.0.s8 %v391
    %v393 = vlaneseq
    %v394 = vshrl.u32 %v393, 7
    %v395 = vsub.s32 %v392, %v394
    %v396 = vrot.slane %v388, %v395
    %v398 = vunpack.c.l.s4 1966171168
    %v399 = vunpack.c.0.s8 %v398
    %v400 = vlaneseq
    %v401 = vshrl.u32 %v400, 7
    %v402 = vsub.s32 %v399, %v401
    %v403 = vrot.slane %v389, %v402
    %v406 = vadd.f32 %v373, %v396
    %v407 = vadd.f32 %v374, %v403
    %s408 = sld [smem:[#allocation2 + $0x83]]
    %v409 = vstv %s408
    %v410 = vmul.f32 %v409, %v121
    %v411 = vmul.f32 %v409, %v123
    %v414 = vcombine.low %v410, %v411
    %v416 = vunpack.c.l.s4 1966171168
    %v417 = vunpack.c.0.s8 %v416
    %v418 = vlaneseq
    %v419 = vshrl.u32 %v418, 7
    %v420 = vsub.s32 %v417, %v419
    %v421 = vrot.slane %v414, %v420
    %v422 = vcombine.high %v421, %v421
    %v424 = vunpack.c.l.s4 1966171168
    %v425 = vunpack.c.0.s8 %v424
    %v426 = vlaneseq
    %v427 = vshrl.u32 %v426, 7
    %v428 = vsub.s32 %v425, %v427
    %v429 = vrot.slane %v421, %v428
    %v431 = vunpack.c.l.s4 1966171168
    %v432 = vunpack.c.0.s8 %v431
    %v433 = vlaneseq
    %v434 = vshrl.u32 %v433, 7
    %v435 = vsub.s32 %v432, %v434
    %v436 = vrot.slane %v422, %v435
    %v439 = vadd.f32 %v406, %v429
    %v440 = vadd.f32 %v407, %v436
    %v443 = vcombine.low %v439, %v440
    %v445 = vunpack.c.l.s4 1966171168
    %v446 = vunpack.c.0.s8 %v445
    %v447 = vlaneseq
    %v448 = vshrl.u32 %v447, 7
    %v449 = vsub.s32 %v446, %v448
    %v450 = vrot.slane %v443, %v449
    %v451 = vcombine.high %v450, %v450
    %v453 = vunpack.c.l.s4 1966171168
    %v454 = vunpack.c.0.s8 %v453
    %v455 = vlaneseq
    %v456 = vshrl.u32 %v455, 7
    %v457 = vsub.s32 %v454, %v456
    %v458 = vrot.slane %v450, %v457
    %v460 = vunpack.c.l.s4 1966171168
    %v461 = vunpack.c.0.s8 %v460
    %v462 = vlaneseq
    %v463 = vshrl.u32 %v462, 7
    %v464 = vsub.s32 %v461, %v463
    %v465 = vrot.slane %v451, %v464
    %s466 = sld [smem:[#allocation2 + $0x104]]
    %v467 = vstv %s466
    %v468 = vmul.f32 %v467, %v81
    %v469 = vmul.f32 %v467, %v82
    %s470 = sld [smem:[#allocation2 + $0x105]]
    %v471 = vstv %s470
    %v472 = vmul.f32 %v471, %v83
    %v473 = vmul.f32 %v471, %v84
    %v474 = vadd.f32 %v468, %v472
    %v475 = vadd.f32 %v469, %v473
    %s476 = sld [smem:[#allocation2 + $0x106]]
    %v477 = vstv %s476
    %v478 = vadd.f32 %v474, %v477
    %v479 = vadd.f32 %v475, %v477
    %s480 = sld [smem:[#allocation2 + $0x100]]
    %v481 = vstv %s480
    %v482 = vmul.f32 %v481, %v109
    %v483 = vmul.f32 %v481, %v111
    %v486 = vcombine.low %v482, %v483
    %v488 = vunpack.c.l.s4 1966171168
    %v489 = vunpack.c.0.s8 %v488
    %v490 = vlaneseq
    %v491 = vshrl.u32 %v490, 7
    %v492 = vsub.s32 %v489, %v491
    %v493 = vrot.slane %v486, %v492
    %v494 = vcombine.high %v493, %v493
    %v496 = vunpack.c.l.s4 1966171168
    %v497 = vunpack.c.0.s8 %v496
    %v498 = vlaneseq
    %v499 = vshrl.u32 %v498, 7
    %v500 = vsub.s32 %v497, %v499
    %v501 = vrot.slane %v493, %v500
    %v503 = vunpack.c.l.s4 1966171168
    %v504 = vunpack.c.0.s8 %v503
    %v505 = vlaneseq
    %v506 = vshrl.u32 %v505, 7
    %v507 = vsub.s32 %v504, %v506
    %v508 = vrot.slane %v494, %v507
    %v511 = vadd.f32 %v478, %v501
    %v512 = vadd.f32 %v479, %v508
    %s513 = sld [smem:[#allocation2 + $0x101]]
    %v514 = vstv %s513
    %v515 = vmul.f32 %v514, %v113
    %v516 = vmul.f32 %v514, %v115
    %v519 = vcombine.low %v515, %v516
    %v521 = vunpack.c.l.s4 1966171168
    %v522 = vunpack.c.0.s8 %v521
    %v523 = vlaneseq
    %v524 = vshrl.u32 %v523, 7
    %v525 = vsub.s32 %v522, %v524
    %v526 = vrot.slane %v519, %v525
    %v527 = vcombine.high %v526, %v526
    %v529 = vunpack.c.l.s4 1966171168
    %v530 = vunpack.c.0.s8 %v529
    %v531 = vlaneseq
    %v532 = vshrl.u32 %v531, 7
    %v533 = vsub.s32 %v530, %v532
    %v534 = vrot.slane %v526, %v533
    %v536 = vunpack.c.l.s4 1966171168
    %v537 = vunpack.c.0.s8 %v536
    %v538 = vlaneseq
    %v539 = vshrl.u32 %v538, 7
    %v540 = vsub.s32 %v537, %v539
    %v541 = vrot.slane %v527, %v540
    %v544 = vadd.f32 %v511, %v534
    %v545 = vadd.f32 %v512, %v541
    %s546 = sld [smem:[#allocation2 + $0x102]]
    %v547 = vstv %s546
    %v548 = vmul.f32 %v547, %v117
    %v549 = vmul.f32 %v547, %v119
    %v552 = vcombine.low %v548, %v549
    %v554 = vunpack.c.l.s4 1966171168
    %v555 = vunpack.c.0.s8 %v554
    %v556 = vlaneseq
    %v557 = vshrl.u32 %v556, 7
    %v558 = vsub.s32 %v555, %v557
    %v559 = vrot.slane %v552, %v558
    %v560 = vcombine.high %v559, %v559
    %v562 = vunpack.c.l.s4 1966171168
    %v563 = vunpack.c.0.s8 %v562
    %v564 = vlaneseq
    %v565 = vshrl.u32 %v564, 7
    %v566 = vsub.s32 %v563, %v565
    %v567 = vrot.slane %v559, %v566
    %v569 = vunpack.c.l.s4 1966171168
    %v570 = vunpack.c.0.s8 %v569
    %v571 = vlaneseq
    %v572 = vshrl.u32 %v571, 7
    %v573 = vsub.s32 %v570, %v572
    %v574 = vrot.slane %v560, %v573
    %v577 = vadd.f32 %v544, %v567
    %v578 = vadd.f32 %v545, %v574
    %s579 = sld [smem:[#allocation2 + $0x103]]
    %v580 = vstv %s579
    %v581 = vmul.f32 %v580, %v121
    %v582 = vmul.f32 %v580, %v123
    %v585 = vcombine.low %v581, %v582
    %v587 = vunpack.c.l.s4 1966171168
    %v588 = vunpack.c.0.s8 %v587
    %v589 = vlaneseq
    %v590 = vshrl.u32 %v589, 7
    %v591 = vsub.s32 %v588, %v590
    %v592 = vrot.slane %v585, %v591
    %v593 = vcombine.high %v592, %v592
    %v595 = vunpack.c.l.s4 1966171168
    %v596 = vunpack.c.0.s8 %v595
    %v597 = vlaneseq
    %v598 = vshrl.u32 %v597, 7
    %v599 = vsub.s32 %v596, %v598
    %v600 = vrot.slane %v592, %v599
    %v602 = vunpack.c.l.s4 1966171168
    %v603 = vunpack.c.0.s8 %v602
    %v604 = vlaneseq
    %v605 = vshrl.u32 %v604, 7
    %v606 = vsub.s32 %v603, %v605
    %v607 = vrot.slane %v593, %v606
    %v610 = vadd.f32 %v577, %v600
    %v611 = vadd.f32 %v578, %v607
    %v614 = vcombine.low %v610, %v611
    %v616 = vunpack.c.l.s4 1966171168
    %v617 = vunpack.c.0.s8 %v616
    %v618 = vlaneseq
    %v619 = vshrl.u32 %v618, 7
    %v620 = vsub.s32 %v617, %v619
    %v621 = vrot.slane %v614, %v620
    %v622 = vcombine.high %v621, %v621
    %v624 = vunpack.c.l.s4 1966171168
    %v625 = vunpack.c.0.s8 %v624
    %v626 = vlaneseq
    %v627 = vshrl.u32 %v626, 7
    %v628 = vsub.s32 %v625, %v627
    %v629 = vrot.slane %v621, %v628
    %v631 = vunpack.c.l.s4 1966171168
    %v632 = vunpack.c.0.s8 %v631
    %v633 = vlaneseq
    %v634 = vshrl.u32 %v633, 7
    %v635 = vsub.s32 %v632, %v634
    %v636 = vrot.slane %v622, %v635
    %v637 = vlaneseq
    %v638 = vshrl.u32 %v637, 7
    %v639 = vsub.s32 0, %v638
    %v640 = vrot.slane %v287, %v639
    %v641 = vlaneseq
    %v642 = vshrl.u32 %v641, 7
    %v643 = vsub.s32 1, %v642
    %v644 = vrot.slane %v287, %v643
    %v645 = vlaneseq
    %v646 = vshrl.u32 %v645, 7
    %v647 = vsub.s32 0, %v646
    %v648 = vrot.slane %v294, %v647
    %v649 = vlaneseq
    %v650 = vshrl.u32 %v649, 7
    %v651 = vsub.s32 1, %v650
    %v652 = vrot.slane %v294, %v651
    %v657 = vlaneseq
    %v658 = vshrl.u32 %v657, 7
    %v659 = vsub.s32 0, %v658
    %v660 = vrot.slane %v458, %v659
    %v661 = vlaneseq
    %v662 = vshrl.u32 %v661, 7
    %v663 = vsub.s32 1, %v662
    %v664 = vrot.slane %v458, %v663
    %v665 = vlaneseq
    %v666 = vshrl.u32 %v665, 7
    %v667 = vsub.s32 0, %v666
    %v668 = vrot.slane %v465, %v667
    %v669 = vlaneseq
    %v670 = vshrl.u32 %v669, 7
    %v671 = vsub.s32 1, %v670
    %v672 = vrot.slane %v465, %v671
    %v677 = vlaneseq
    %v678 = vshrl.u32 %v677, 7
    %v679 = vsub.s32 0, %v678
    %v680 = vrot.slane %v629, %v679
    %v681 = vlaneseq
    %v682 = vshrl.u32 %v681, 7
    %v683 = vsub.s32 1, %v682
    %v684 = vrot.slane %v629, %v683
    %v685 = vlaneseq
    %v686 = vshrl.u32 %v685, 7
    %v687 = vsub.s32 0, %v686
    %v688 = vrot.slane %v636, %v687
    %v689 = vlaneseq
    %v690 = vshrl.u32 %v689, 7
    %v691 = vsub.s32 1, %v690
    %v692 = vrot.slane %v636, %v691
    %v697 = vsel %vm85, %v640, %v660
    %v698 = vsel %vm85, %v644, %v664
    %v699 = vsel %vm85, %v648, %v668
    %v700 = vsel %vm85, %v652, %v672
    %vm701 = vcmask 1041408
    %v702 = vsel %vm701, %v697, %v680
    %v703 = vsel %vm701, %v698, %v684
    %v704 = vsel %vm701, %v699, %v688
    %v705 = vsel %vm701, %v700, %v692
    %v710 = vcombine.low %v702, %v703
    %v711 = vcombine.low %v704, %v705
    %714 = vst [vmem:[%s5] sm:$0x77] %v710
    %715 = vst [vmem:[%s5 + $0x8] sm:$0x77] %v711
    %v716 = vld [vmem:[%s3] sm:$0x77]
    %v717 = vld [vmem:[%s3 + $0x8] sm:$0x77]
    %719 = vset.pattern.permute.xlu0 0
    %720 = vperm.xlu0 %719, %v36
    %v721 = vpop.permute.xlu0 %720
    %v723 = vunpack.c.l.s4 839922192
    %v724 = vunpack.c.0.s8 %v723
    %v725 = vlaneseq
    %v726 = vshrl.u32 %v725, 7
    %v727 = vsub.s32 %v724, %v726
    %v728 = vrot.slane %v721, %v727
    %v730 = vsub.f32 %v716, %v728
    %v731 = vsub.f32 %v717, %v728
    %733 = vset.pattern.permute.xlu0 0
    %734 = vperm.xlu0 %733, %v37
    %v735 = vpop.permute.xlu0 %734
    %v737 = vunpack.c.l.s4 839922192
    %v738 = vunpack.c.0.s8 %v737
    %v739 = vlaneseq
    %v740 = vshrl.u32 %v739, 7
    %v741 = vsub.s32 %v738, %v740
    %v742 = vrot.slane %v735, %v741
    %v744 = vmul.f32 %v730, %v742
    %v745 = vmul.f32 %v731, %v742
    %746 = vst [vmem:[%s6] sm:$0x77] %v744
    %747 = vst [vmem:[%s6 + $0x8] sm:$0x77] %v745
    // Predicated region
    $region22: #{default_data_processor_forward.1} parent=1 // pred_check
      _
    $region23: #{default_data_processor_forward.1} parent=1 // pred_check_branch
      %749 = sbr.rel (0) target = $region25
    $region24: #{default_data_processor_forward.1} parent=1 // pred_region
      _
    $region25: #{default_data_processor_forward.1} parent=1 // pred_fallthru
      _
    // Predicated region
    $region26: #{default_data_processor_forward.1} parent=1 // pred_check
      _
    $region27: #{default_data_processor_forward.1} parent=1 // pred_check_branch
      %751 = sbr.rel (0) target = $region29
    $region28: #{default_data_processor_forward.1} parent=1 // pred_region
      _
    $region29: #{default_data_processor_forward.1} parent=1 // pred_fallthru
      _
    // Predicated region
    $region30: #{default_data_processor_forward.1} parent=1 // pred_check
      _
    $region31: #{default_data_processor_forward.1} parent=1 // pred_check_branch
      %753 = sbr.rel (0) target = $region33
    $region32: #{default_data_processor_forward.1} parent=1 // pred_region
      _
    $region33: #{default_data_processor_forward.1} parent=1 // pred_fallthru
      _
    // Predicated region
    $region34: #{default_data_processor_forward.1} parent=1 // pred_check
      _
    $region35: #{default_data_processor_forward.1} parent=1 // pred_check_branch
      %755 = sbr.rel (0) target = $region37
    $region36: #{default_data_processor_forward.1} parent=1 // pred_region
      _
    $region37: #{default_data_processor_forward.1} parent=1 // pred_fallthru
      _
    // Predicated region
    $region38: #{default_data_processor_forward.1} parent=1 // pred_check
      _
    $region39: #{default_data_processor_forward.1} parent=1 // pred_check_branch
      %757 = sbr.rel (0) target = $region41
    $region40: #{default_data_processor_forward.1} parent=1 // pred_region
      _
    $region41: #{default_data_processor_forward.1} parent=1 // pred_fallthru
      _
    // Predicated region
    $region42: #{default_data_processor_forward.1} parent=1 // pred_check
      _
    $region43: #{default_data_processor_forward.1} parent=1 // pred_check_branch
      %759 = sbr.rel (0) target = $region45
    $region44: #{default_data_processor_forward.1} parent=1 // pred_region
      _
    $region45: #{default_data_processor_forward.1} parent=1 // pred_fallthru
      _
    %760 = vsyncpa [#allocation3], 1

</llo_original>
